<compile_context>
chip_gen: v6e
topology: v6e:2x2x1
jax: 0.10.0
libtpu: 0.0.40
codegen_flags: <defaults>
</compile_context>

<pallas_src>
import functools

import jax
import jax.numpy as jnp
from jax.experimental import pallas as pl
from jax.experimental.pallas import tpu as pltpu

# input dim = X feature dim (4) + 1 (the appended T column) = 5
LAYERS_SIZE = (5, 32, 16, 1)


def _round_up(n, m):
    return ((n + m - 1) // m) * m


def _cdiv(a, b):
    return -(-a // b)


def _choose_tile(B, tb_cap, lane=128):
    """Pick (tile, padded_batch, n_tiles): tile is a multiple of 128, tiles are
    balanced to bound padding waste, and large single-tile batches are split
    into >= 2 tiles so both v7x TensorCores are used."""
    assert tb_cap % lane == 0 and tb_cap > 0, "tile cap must be a multiple of 128"
    b128 = _round_up(max(B, 1), lane)
    n = max(1, _cdiv(b128, tb_cap))          # minimum tiles respecting the cap
    if n == 1 and b128 >= 4096:              # big enough: split for megacore
        n = 2
    tb = _round_up(_cdiv(b128, n), lane)     # balanced tile, multiple of 128
    n = _cdiv(b128, tb)                      # rounding may reduce tile count
    return tb, n * tb, n


def _sigmoid(x):
    # tanh-based sigmoid: one EUP push instead of exp + full-precision divide.
    return 0.5 * jnp.tanh(0.5 * x) + 0.5


def mlp_kernel(xt_ref, tt_ref, w1x_ref, w2_ref, small_ref, out_ref):
    """Fused 3-layer MLP on one batch tile, batch on the 128-lane axis.

    xt_ref    : (d_x, TB) bf16   -- X^T tile
    tt_ref    : (1,  TB) f32     -- T^T tile (the fused "concat" column, f32)
    w1x_ref   : (H1, d_x) bf16   -- layer-1 weight, X columns (pre-cast)
    w2_ref    : (H2, H1)  bf16   -- layer-2 weight (pre-cast)
    small_ref : (H1, 4)   f32    -- packed small operands:
                  col 0 = w1[:, d_x] (T column of layer-1 weight)
                  col 1 = b1
                  col 2 = b2 in rows [0,H2), b3 at row H2
                  col 3 = w3 in rows [0,H2)
    out_ref   : (1, TB) f32
    """
    h2_dim = w2_ref.shape[0]

    w1t = small_ref[:, 0:1]                         # (H1, 1)
    b1 = small_ref[:, 1:2]                          # (H1, 1)
    b2 = small_ref[0:h2_dim, 2:3]                   # (H2, 1)
    b3 = small_ref[h2_dim:h2_dim + 1, 2:3]          # (1, 1)
    w3 = small_ref[0:h2_dim, 3:4]                   # (H2, 1)

    # ---- Layer 1: Linear(5 -> H1) with the T column fused, then Sigmoid ----
    h1 = jnp.dot(w1x_ref[...], xt_ref[...], preferred_element_type=jnp.float32)
    h1 = _sigmoid(h1 + w1t * tt_ref[...] + b1)      # (H1, TB) f32

    # ---- Layer 2: Linear(H1 -> H2) + Sigmoid ----
    h2 = jnp.dot(w2_ref[...], h1.astype(jnp.bfloat16),
                 preferred_element_type=jnp.float32)
    h2 = _sigmoid(h2 + b2)                          # (H2, TB) f32

    # ---- Layer 3: Linear(H2 -> 1), no activation (VPU mul + sublane reduce) ----
    out = jnp.sum(w3 * h2, axis=0, keepdims=True) + b3
    out_ref[...] = out.astype(out_ref.dtype)


def init_params(key, layers_size):
    """Deterministic init mirroring nn.Linear's U(-1/sqrt(fan_in), 1/sqrt(fan_in)).

    Weights kept in PyTorch layout (out_features, in_features); biases as
    (out_features, 1) columns (convenient for the transposed layout)."""
    params = []
    keys = jax.random.split(key, len(layers_size) - 1)
    for i, k in enumerate(keys):
        fan_in, fan_out = layers_size[i], layers_size[i + 1]
        bound = 1.0 / float(fan_in) ** 0.5
        kw, kb = jax.random.split(k)
        w = jax.random.uniform(kw, (fan_out, fan_in), jnp.float32, -bound, bound)
        b = jax.random.uniform(kb, (fan_out, 1), jnp.float32, -bound, bound)
        params.append((w, b))
    return params


@functools.partial(jax.jit, static_argnames=("tb_cap",))
def neural_network_regression_forward(X, T, params, *, tb_cap=16384):
    """Equivalent of Neural_network_regression.forward(X, T) -> (batch, 1)."""
    (w1, b1), (w2, b2), (w3, b3) = params
    B, d_x = X.shape
    h1_dim = w1.shape[0]
    h2_dim = w2.shape[0]
    assert h1_dim > h2_dim, "packed-operand layout needs H1 > H2 (b3 slot)"

    tb, Bp, grid_n = _choose_tile(B, tb_cap)
    assert tb % 128 == 0  # lane-aligned batch tile (8,128) block constraint

    # Layout plumbing (fused into this jit): batch on lanes, bf16 matmul input.
    xt = jnp.pad(X.astype(jnp.bfloat16).T, ((0, 0), (0, Bp - B)))        # (d_x, Bp)
    tt = jnp.pad(T.astype(jnp.float32)[None, :], ((0, 0), (0, Bp - B)))  # (1, Bp)

    # Pre-cast weights once (no per-grid-step VPU casts inside the kernel).
    w1x = w1[:, :d_x].astype(jnp.bfloat16)           # (H1, d_x)
    w2b = w2.astype(jnp.bfloat16)                    # (H2, H1)

    # Pack the small f32 operands into one (H1, 4) array.
    small = jnp.zeros((h1_dim, 4), jnp.float32)
    small = small.at[:, 0].set(w1[:, d_x].astype(jnp.float32))           # w1t
    small = small.at[:, 1].set(b1[:, 0].astype(jnp.float32))             # b1
    small = small.at[0:h2_dim, 2].set(b2[:, 0].astype(jnp.float32))      # b2
    small = small.at[h2_dim, 2].set(b3[0, 0].astype(jnp.float32))        # b3
    small = small.at[0:h2_dim, 3].set(w3[0, :].astype(jnp.float32))      # w3

    in_specs = [
        pl.BlockSpec((d_x, tb), lambda i: (0, i)),          # X^T tile
        pl.BlockSpec((1, tb), lambda i: (0, i)),            # T^T tile
        pl.BlockSpec((h1_dim, d_x), lambda i: (0, 0)),      # W1x (resident)
        pl.BlockSpec((h2_dim, h1_dim), lambda i: (0, 0)),   # W2  (resident)
        pl.BlockSpec((h1_dim, 4), lambda i: (0, 0)),        # packed small ops
    ]
    out_specs = pl.BlockSpec((1, tb), lambda i: (0, i))

    cp_kwargs = dict(dimension_semantics=("parallel",))     # megacore on v7x
    if tb > 16384:
        # ~450 B of VMEM per batch column (double-buffered IO + f32
        # intermediates); raise the scoped limit beyond v5e's 16 MiB default,
        # but stay well under v7x's 64 MiB physical VMEM.
        cp_kwargs["vmem_limit_bytes"] = min(int(tb) * 512 + (4 << 20), 56 << 20)

    out_t = pl.pallas_call(
        mlp_kernel,
        grid=(grid_n,),
        in_specs=in_specs,
        out_specs=out_specs,
        out_shape=jax.ShapeDtypeStruct((1, Bp), jnp.float32),
        compiler_params=pltpu.CompilerParams(**cp_kwargs),
    )(xt, tt, w1x, w2b, small)

    # (1, Bp) -> (B, 1); same linear order, so a cheap reshape of the slice.
    return out_t[0, :B].reshape(B, 1)


def _reference_forward_f32(X, T, params):
    """Pure-JAX f32 reference with exact PyTorch semantics."""
    h = jnp.concatenate([X, T[:, None]], axis=1).astype(jnp.float32)
    n = len(params)
    for i, (w, b) in enumerate(params):
        h = h @ w.T + b.T
        if i != n - 1:
            h = jax.nn.sigmoid(h)
    return h


def _reference_forward_mixed(X, T, params):
    """Pure-JAX reference mirroring the kernel's bf16-matmul / f32 / tanh recipe."""
    (w1, b1), (w2, b2), (w3, b3) = params
    d_x = X.shape[1]
    h1 = jnp.dot(X.astype(jnp.bfloat16), w1[:, :d_x].astype(jnp.bfloat16).T,
                 preferred_element_type=jnp.float32)
    h1 = _sigmoid(h1 + T[:, None].astype(jnp.float32) * w1[:, d_x:d_x + 1].T + b1.T)
    h2 = jnp.dot(h1.astype(jnp.bfloat16), w2.astype(jnp.bfloat16).T,
                 preferred_element_type=jnp.float32)
    h2 = _sigmoid(h2 + b2.T)
    return h2 @ w3.T + b3.T


if __name__ == "__main__":
    key = jax.random.PRNGKey(0)
    k_params, k_x, k_t = jax.random.split(key, 3)

    params = init_params(k_params, LAYERS_SIZE)

    batch = 8
    x_dim = LAYERS_SIZE[0] - 1          # 4 covariates; T supplies the 5th column
    X = jax.random.normal(k_x, (batch, x_dim), jnp.float32)
    T = jax.random.normal(k_t, (batch,), jnp.float32)

    out = neural_network_regression_forward(X, T, params)
    out = jax.block_until_ready(out)
    assert out.shape == (batch, LAYERS_SIZE[-1])

    # Tight check vs a reference using the same bf16-matmul / tanh-sigmoid recipe.
    ref_mixed = _reference_forward_mixed(X, T, params)
    assert jnp.allclose(out, ref_mixed, atol=1e-3, rtol=1e-3), "mismatch vs mixed ref"

    # Looser check vs the exact f32 PyTorch-semantics reference (bf16 drift only).
    ref_f32 = _reference_forward_f32(X, T, params)
    assert jnp.allclose(out, ref_f32, atol=5e-2, rtol=5e-2), "mismatch vs f32 ref"

    print("KERNEL_OK")
</pallas_src>

<mosaic_0001>
module attributes {stable_mosaic.version = 11 : i64} {
  func.func @mlp_kernel(%arg0: i32, %arg1: memref<4x128xbf16, #tpu.memory_space<vmem>>, %arg2: memref<1x128xf32, #tpu.memory_space<vmem>>, %arg3: memref<32x4xbf16, #tpu.memory_space<vmem>>, %arg4: memref<16x32xbf16, #tpu.memory_space<vmem>>, %arg5: memref<32x4xf32, #tpu.memory_space<vmem>>, %arg6: memref<1x128xf32, #tpu.memory_space<vmem>>) attributes {dimension_semantics = [#tpu.dimension_semantics<parallel>], iteration_bounds = array<i64: 1>, scalar_prefetch = 0 : i64, scratch_operands = 0 : i64, tpu.core_type = #tpu.core_type<tc>, window_params = [{transform_indices = @transform_0, window_bounds = array<i64: 4, 128>}, {transform_indices = @transform_1, window_bounds = array<i64: 1, 128>}, {pipeline_mode = #tpu.pipeline_mode<synchronous>, transform_indices = @transform_2, window_bounds = array<i64: 32, 4>}, {pipeline_mode = #tpu.pipeline_mode<synchronous>, transform_indices = @transform_3, window_bounds = array<i64: 16, 32>}, {pipeline_mode = #tpu.pipeline_mode<synchronous>, transform_indices = @transform_4, window_bounds = array<i64: 32, 4>}, {transform_indices = @transform_5, window_bounds = array<i64: 1, 128>}]} {
    %c0 = arith.constant 0 : index
    %c0_0 = arith.constant 0 : index
    %0 = vector.load %arg5[%c0, %c0_0] : memref<32x4xf32, #tpu.memory_space<vmem>>, vector<32x1xf32>
    %c0_1 = arith.constant 0 : index
    %c1 = arith.constant 1 : index
    %1 = vector.load %arg5[%c0_1, %c1] : memref<32x4xf32, #tpu.memory_space<vmem>>, vector<32x1xf32>
    %c0_2 = arith.constant 0 : index
    %c2 = arith.constant 2 : index
    %2 = vector.load %arg5[%c0_2, %c2] : memref<32x4xf32, #tpu.memory_space<vmem>>, vector<16x1xf32>
    %c16 = arith.constant 16 : index
    %c2_3 = arith.constant 2 : index
    %3 = vector.load %arg5[%c16, %c2_3] : memref<32x4xf32, #tpu.memory_space<vmem>>, vector<1x1xf32>
    %c0_4 = arith.constant 0 : index
    %c3 = arith.constant 3 : index
    %4 = vector.load %arg5[%c0_4, %c3] : memref<32x4xf32, #tpu.memory_space<vmem>>, vector<16x1xf32>
    %c0_5 = arith.constant 0 : index
    %c0_6 = arith.constant 0 : index
    %5 = vector.load %arg3[%c0_5, %c0_6] : memref<32x4xbf16, #tpu.memory_space<vmem>>, vector<32x4xbf16>
    %c0_7 = arith.constant 0 : index
    %c0_8 = arith.constant 0 : index
    %6 = vector.load %arg1[%c0_7, %c0_8] : memref<4x128xbf16, #tpu.memory_space<vmem>>, vector<4x128xbf16>
    %cst = arith.constant dense<0.000000e+00> : vector<32x128xf32>
    %7 = tpu.matmul %5, %6, %cst {dimension_numbers = #tpu.dot_dimension_numbers<[1], [0], [0], [1], [0, 0, 1, 1], [], []>} : vector<32x4xbf16>, vector<4x128xbf16>, vector<32x128xf32> -> vector<32x128xf32>
    %c0_9 = arith.constant 0 : index
    %c0_10 = arith.constant 0 : index
    %8 = vector.load %arg2[%c0_9, %c0_10] : memref<1x128xf32, #tpu.memory_space<vmem>>, vector<1x128xf32>
    %9 = vector.broadcast %0 : vector<32x1xf32> to vector<32x128xf32>
    %10 = vector.broadcast %8 : vector<1x128xf32> to vector<32x128xf32>
    %11 = arith.mulf %9, %10 : vector<32x128xf32>
    %12 = arith.addf %7, %11 : vector<32x128xf32>
    %13 = vector.broadcast %1 : vector<32x1xf32> to vector<32x128xf32>
    %14 = arith.addf %12, %13 : vector<32x128xf32>
    %cst_11 = arith.constant 5.000000e-01 : f32
    %15 = vector.broadcast %cst_11 : f32 to vector<32x128xf32>
    %16 = arith.mulf %15, %14 : vector<32x128xf32>
    %17 = math.tanh %16 : vector<32x128xf32>
    %cst_12 = arith.constant 5.000000e-01 : f32
    %18 = vector.broadcast %cst_12 : f32 to vector<32x128xf32>
    %19 = arith.mulf %18, %17 : vector<32x128xf32>
    %cst_13 = arith.constant 5.000000e-01 : f32
    %20 = vector.broadcast %cst_13 : f32 to vector<32x128xf32>
    %21 = arith.addf %19, %20 : vector<32x128xf32>
    %c0_14 = arith.constant 0 : index
    %c0_15 = arith.constant 0 : index
    %22 = vector.load %arg4[%c0_14, %c0_15] : memref<16x32xbf16, #tpu.memory_space<vmem>>, vector<16x32xbf16>
    %23 = arith.truncf %21 : vector<32x128xf32> to vector<32x128xbf16>
    %cst_16 = arith.constant dense<0.000000e+00> : vector<16x128xf32>
    %24 = tpu.matmul %22, %23, %cst_16 {dimension_numbers = #tpu.dot_dimension_numbers<[1], [0], [0], [1], [0, 0, 1, 1], [], []>} : vector<16x32xbf16>, vector<32x128xbf16>, vector<16x128xf32> -> vector<16x128xf32>
    %25 = vector.broadcast %2 : vector<16x1xf32> to vector<16x128xf32>
    %26 = arith.addf %24, %25 : vector<16x128xf32>
    %cst_17 = arith.constant 5.000000e-01 : f32
    %27 = vector.broadcast %cst_17 : f32 to vector<16x128xf32>
    %28 = arith.mulf %27, %26 : vector<16x128xf32>
    %29 = math.tanh %28 : vector<16x128xf32>
    %cst_18 = arith.constant 5.000000e-01 : f32
    %30 = vector.broadcast %cst_18 : f32 to vector<16x128xf32>
    %31 = arith.mulf %30, %29 : vector<16x128xf32>
    %cst_19 = arith.constant 5.000000e-01 : f32
    %32 = vector.broadcast %cst_19 : f32 to vector<16x128xf32>
    %33 = arith.addf %31, %32 : vector<16x128xf32>
    %34 = vector.broadcast %4 : vector<16x1xf32> to vector<16x128xf32>
    %35 = arith.mulf %34, %33 : vector<16x128xf32>
    %cst_20 = arith.constant dense<0.000000e+00> : vector<128xf32>
    %36 = vector.multi_reduction <add>, %35, %cst_20 [0] : vector<16x128xf32> to vector<128xf32>
    %37 = vector.shape_cast %36 : vector<128xf32> to vector<1x128xf32>
    %38 = vector.broadcast %3 : vector<1x1xf32> to vector<1x128xf32>
    %39 = arith.addf %37, %38 : vector<1x128xf32>
    %c0_21 = arith.constant 0 : index
    %c0_22 = arith.constant 0 : index
    %40 = vector.load %arg6[%c0_21, %c0_22] : memref<1x128xf32, #tpu.memory_space<vmem>>, vector<1x128xf32>
    tpu.vector_store %arg6[%c0_21, %c0_22], %39 {strides = array<i32>} : memref<1x128xf32, #tpu.memory_space<vmem>>, vector<1x128xf32>,
    return
  }
  func.func @transform_0(%arg0: i32) -> (i32, i32) {
    %c0_i32 = arith.constant 0 : i32
    %c0_i32_0 = arith.constant 0 : i32
    return %c0_i32, %arg0 : i32, i32
  }
  func.func @transform_1(%arg0: i32) -> (i32, i32) {
    %c0_i32 = arith.constant 0 : i32
    %c0_i32_0 = arith.constant 0 : i32
    return %c0_i32, %arg0 : i32, i32
  }
  func.func @transform_2(%arg0: i32) -> (i32, i32) {
    %c0_i32 = arith.constant 0 : i32
    %c0_i32_0 = arith.constant 0 : i32
    %c0_i32_1 = arith.constant 0 : i32
    return %c0_i32, %c0_i32_0 : i32, i32
  }
  func.func @transform_3(%arg0: i32) -> (i32, i32) {
    %c0_i32 = arith.constant 0 : i32
    %c0_i32_0 = arith.constant 0 : i32
    %c0_i32_1 = arith.constant 0 : i32
    return %c0_i32, %c0_i32_0 : i32, i32
  }
  func.func @transform_4(%arg0: i32) -> (i32, i32) {
    %c0_i32 = arith.constant 0 : i32
    %c0_i32_0 = arith.constant 0 : i32
    %c0_i32_1 = arith.constant 0 : i32
    return %c0_i32, %c0_i32_0 : i32, i32
  }
  func.func @transform_5(%arg0: i32) -> (i32, i32) {
    %c0_i32 = arith.constant 0 : i32
    %c0_i32_0 = arith.constant 0 : i32
    return %c0_i32, %arg0 : i32, i32
  }
}

</mosaic_0001>

<llo_original>
// kernel: neural_network_regression_forward.1
$region0: #{neural_network_regression_forward.1}
  #allocation0 [shape = 'u32[]', space=smem, size = 0x4, offset = 0x4, fixed_abs, tag = 'smem constant byte address 0x4 - core index']
  #allocation1 [shape = 'u32[144,128]{1,0:T(1,128)}', space=vmem, size = 0x12000, scoped, tag = 'internal scratch']
  %s0 = inlined_call_operand.vmem [shape: bf16[4,128], index: 0, kind: input, shape index: {}]
  %s1 = inlined_call_operand.vmem [shape: f32[1,128], index: 1, kind: input, shape index: {}]
  %s2 = inlined_call_operand.vmem [shape: bf16[32,4], index: 2, kind: input, shape index: {}]
  %s3 = inlined_call_operand.vmem [shape: bf16[16,32], index: 3, kind: input, shape index: {}]
  %s4 = inlined_call_operand.vmem [shape: f32[32,4], index: 4, kind: input, shape index: {}]
  %s5 = inlined_call_operand.vmem [shape: f32[1,128], index: 5, kind: output, shape index: {}]
  %s6 = sld [smem:[#allocation0]]
  $region30: #{neural_network_regression_forward.1} parent=0
    _
  %s8 = ssub.s32 1, %s6
  %s9 = scalar_select 0, %s8, %s6
  // Predicated region
  $region2: #{neural_network_regression_forward.1} parent=0 // pred_check
    _
  $region3: #{neural_network_regression_forward.1} parent=0 // pred_check_branch
    %11 = sbr.rel (0) target = $region5
  $region4: #{neural_network_regression_forward.1} parent=0 // pred_region
    _
  $region5: #{neural_network_regression_forward.1} parent=0 // pred_fallthru
    _
  // Predicated region
  $region6: #{neural_network_regression_forward.1} parent=0 // pred_check
    _
  $region7: #{neural_network_regression_forward.1} parent=0 // pred_check_branch
    %13 = sbr.rel (0) target = $region9
  $region8: #{neural_network_regression_forward.1} parent=0 // pred_region
    _
  $region9: #{neural_network_regression_forward.1} parent=0 // pred_fallthru
    _
  // Predicated region
  $region10: #{neural_network_regression_forward.1} parent=0 // pred_check
    _
  $region11: #{neural_network_regression_forward.1} parent=0 // pred_check_branch
    %15 = sbr.rel (0) target = $region13
  $region12: #{neural_network_regression_forward.1} parent=0 // pred_region
    _
  $region13: #{neural_network_regression_forward.1} parent=0 // pred_fallthru
    _
  // Predicated region
  $region14: #{neural_network_regression_forward.1} parent=0 // pred_check
    _
  $region15: #{neural_network_regression_forward.1} parent=0 // pred_check_branch
    %17 = sbr.rel (0) target = $region17
  $region16: #{neural_network_regression_forward.1} parent=0 // pred_region
    _
  $region17: #{neural_network_regression_forward.1} parent=0 // pred_fallthru
    _
  // Predicated region
  $region18: #{neural_network_regression_forward.1} parent=0 // pred_check
    _
  $region19: #{neural_network_regression_forward.1} parent=0 // pred_check_branch
    %19 = sbr.rel (0) target = $region21
  $region20: #{neural_network_regression_forward.1} parent=0 // pred_region
    _
  $region21: #{neural_network_regression_forward.1} parent=0 // pred_fallthru
    _
  %v21 = vld [vmem:[%s4] sm:$0xff]
  %v22 = vld [vmem:[%s4 + $0x8] sm:$0xff]
  %v23 = vld [vmem:[%s4 + $0x10] sm:$0xff]
  %v24 = vld [vmem:[%s4 + $0x18] sm:$0xff]
  %v25 = vld [vmem:[%s4 + $0x10] sm:$0x1]
  %v26 = vld [vmem:[%s2] sm:$0xf]
  %v27 = vld [vmem:[%s2 + $0x4] sm:$0xf]
  %v28 = vld [vmem:[%s2 + $0x8] sm:$0xf]
  %v29 = vld [vmem:[%s2 + $0xc] sm:$0xf]
  %v30 = vld [vmem:[%s0] sm:$0x3]
  %v31 = vld [vmem:[%s1] sm:$0x1]
  %33 = vset.pattern.permute.xlu0 0
  %34 = vperm.xlu0 %33, %v21
  %v35 = vpop.permute.xlu0 %34
  %38 = vset.pattern.permute.xlu0 0
  %39 = vperm.xlu0 %38, %v22
  %v40 = vpop.permute.xlu0 %39
  %43 = vset.pattern.permute.xlu0 0
  %44 = vperm.xlu0 %43, %v23
  %v45 = vpop.permute.xlu0 %44
  %48 = vset.pattern.permute.xlu0 0
  %49 = vperm.xlu0 %48, %v24
  %v50 = vpop.permute.xlu0 %49
  %v53 = vlaneseq
  %v54 = vshrl.u32 %v53, 7
  %v55 = vsub.s32 0, %v54
  %v56 = vrot.slane %v31, %v55
  %v58 = vmul.f32 %v35, %v56
  %v59 = vmul.f32 %v40, %v56
  %v60 = vmul.f32 %v45, %v56
  %v61 = vmul.f32 %v50, %v56
  %v66 = vunpack.c.l.b16 %v26
  %v67 = vunpack.c.l.b16 %v27
  %v68 = vunpack.c.l.b16 %v28
  %v69 = vunpack.c.l.b16 %v29
  %v70 = vpack.c.b16 %v67, %v66
  %v71 = vpack.c.b16 %v69, %v68
  %vm72 = vcmask 31744
  %v74 = vsel %vm72, %v70, 0
  %v77 = vsel %vm72, %v71, 0
  %vm79 = vcmask 1041408
  %v81 = vsel %vm79, %v30, 0
  %83 = vmatprep.subr.bf16.mxu0 0
  %84 = vmatpush1.bf16.msra.mxu0 0
  %85 = vmatprep.subr.bf16.mxu0 0
  %86 = vmatpush1.bf16.msra.mxu0 0
  %87 = vmatprep.subr.bf16.mxu0 0
  %88 = vmatpush1.bf16.msra.mxu0 0
  %89 = vmatprep.subr.bf16.mxu0 0
  %90 = vmatpush1.bf16.msra.mxu0 0
  %91 = vmatprep.subr.bf16.mxu0 0
  %92 = vmatpush1.bf16.msra.mxu0 0
  %93 = vmatprep.subr.bf16.mxu0 0
  %94 = vmatpush1.bf16.msra.mxu0 0
  %95 = vmatprep.subr.bf16.mxu0 0
  %96 = vmatpush1.bf16.msra.mxu0 0
  %97 = vmatprep.subr.bf16.mxu0 0
  %98 = vmatpush1.bf16.msra.mxu0 %v81
  %99 = vmatprep.subr.bf16.mxu0 0
  %100 = vmatpush2.bf16.msra.mxu0 0
  %101 = vmatprep.subr.bf16.mxu0 0
  %102 = vmatpush2.bf16.msra.mxu0 0
  %103 = vmatprep.subr.bf16.mxu0 0
  %104 = vmatpush2.bf16.msra.mxu0 0
  %105 = vmatprep.subr.bf16.mxu0 0
  %106 = vmatpush2.bf16.msra.mxu0 0
  %107 = vmatprep.subr.bf16.mxu0 0
  %108 = vmatpush2.bf16.msra.mxu0 0
  %109 = vmatprep.subr.bf16.mxu0 0
  %110 = vmatpush2.bf16.msra.mxu0 0
  %111 = vmatprep.subr.bf16.mxu0 0
  %112 = vmatpush2.bf16.msra.mxu0 0
  %113 = vmatprep.subr.bf16.mxu0 0
  %114 = vmatpush2.bf16.msra.mxu0 0
  %115 = vmatprep.mubr.bf16.mxu0 0
  %116 = vmatmul.mubr.bf16.gmra.mxu0 %v74
  %v117 = vpop.f32.mrf.mxu0
  %v118 = vadd.f32 %v58, %v117
  %v119 = vpop.f32.mrf.mxu0
  %v120 = vpop.f32.mrf.mxu0
  %v121 = vadd.f32 %v59, %v120
  %v122 = vpop.f32.mrf.mxu0
  %123 = vmatprep.mubr.bf16.mxu0 0
  %124 = vmatmul.mubr.bf16.gmra.mxu0 %v77
  %v125 = vpop.f32.mrf.mxu0
  %v126 = vadd.f32 %v60, %v125
  %v127 = vpop.f32.mrf.mxu0
  %v128 = vpop.f32.mrf.mxu0
  %v129 = vadd.f32 %v61, %v128
  %v130 = vpop.f32.mrf.mxu0
  %131 = vdwg.mxu0
  %132 = vset.pattern.permute.xlu0 1
  %133 = vperm.xlu0 %132, %v21
  %v134 = vpop.permute.xlu0 %133
  %136 = vset.pattern.permute.xlu0 1
  %137 = vperm.xlu0 %136, %v22
  %v138 = vpop.permute.xlu0 %137
  %140 = vset.pattern.permute.xlu0 1
  %141 = vperm.xlu0 %140, %v23
  %v142 = vpop.permute.xlu0 %141
  %144 = vset.pattern.permute.xlu0 1
  %145 = vperm.xlu0 %144, %v24
  %v146 = vpop.permute.xlu0 %145
  %v148 = vadd.f32 %v118, %v134
  %v149 = vadd.f32 %v121, %v138
  %v150 = vadd.f32 %v126, %v142
  %v151 = vadd.f32 %v129, %v146
  %v152 = vmul.f32 %v148, 0.5
  %v153 = vmul.f32 %v149, 0.5
  %v154 = vmul.f32 %v150, 0.5
  %v155 = vmul.f32 %v151, 0.5
  %v156 = vtanh.pop %v152
  %v157 = vtanh.pop %v153
  %v158 = vtanh.pop %v154
  %v159 = vtanh.pop %v155
  %v160 = vmul.f32 %v156, 0.5
  %v161 = vmul.f32 %v157, 0.5
  %v162 = vmul.f32 %v158, 0.5
  %v163 = vmul.f32 %v159, 0.5
  %v164 = vadd.f32 %v160, 0.5
  %v165 = vadd.f32 %v161, 0.5
  %v166 = vadd.f32 %v162, 0.5
  %v167 = vadd.f32 %v163, 0.5
  %v168 = vld [vmem:[%s3] sm:$0xf]
  %v169 = vld [vmem:[%s3 + $0x4] sm:$0xf]
  %v170 = vpack.c.bf16 %v165, %v164
  %v171 = vpack.c.bf16 %v167, %v166
  %172 = vset.pattern.permute.xlu0 2
  %173 = vperm.xlu0 %172, %v21
  %v174 = vpop.permute.xlu0 %173
  %176 = vset.pattern.permute.xlu0 2
  %177 = vperm.xlu0 %176, %v22
  %v178 = vpop.permute.xlu0 %177
  %v182 = vunpack.c.l.b16 %v168
  %v183 = vunpack.c.l.b16 %v169
  %v184 = vpack.c.b16 %v183, %v182
  %vm185 = vcmask 261120
  %v187 = vsel %vm185, %v184, 0
  %189 = vmatprep.subr.bf16.mxu0 0
  %190 = vmatpush1.bf16.msra.mxu0 0
  %191 = vmatprep.subr.bf16.mxu0 0
  %192 = vmatpush1.bf16.msra.mxu0 0
  %193 = vmatprep.subr.bf16.mxu0 0
  %194 = vmatpush1.bf16.msra.mxu0 0
  %195 = vmatprep.subr.bf16.mxu0 0
  %196 = vmatpush1.bf16.msra.mxu0 0
  %197 = vmatprep.subr.bf16.mxu0 0
  %198 = vmatpush1.bf16.msra.mxu0 0
  %199 = vmatprep.subr.bf16.mxu0 0
  %200 = vmatpush1.bf16.msra.mxu0 0
  %201 = vmatprep.subr.bf16.mxu0 0
  %202 = vmatpush1.bf16.msra.mxu0 %v171
  %203 = vmatprep.subr.bf16.mxu0 0
  %204 = vmatpush1.bf16.msra.mxu0 %v170
  %205 = vmatprep.subr.bf16.mxu0 0
  %206 = vmatpush2.bf16.msra.mxu0 0
  %207 = vmatprep.subr.bf16.mxu0 0
  %208 = vmatpush2.bf16.msra.mxu0 0
  %209 = vmatprep.subr.bf16.mxu0 0
  %210 = vmatpush2.bf16.msra.mxu0 0
  %211 = vmatprep.subr.bf16.mxu0 0
  %212 = vmatpush2.bf16.msra.mxu0 0
  %213 = vmatprep.subr.bf16.mxu0 0
  %214 = vmatpush2.bf16.msra.mxu0 0
  %215 = vmatprep.subr.bf16.mxu0 0
  %216 = vmatpush2.bf16.msra.mxu0 0
  %217 = vmatprep.subr.bf16.mxu0 0
  %218 = vmatpush2.bf16.msra.mxu0 0
  %219 = vmatprep.subr.bf16.mxu0 0
  %220 = vmatpush2.bf16.msra.mxu0 0
  %221 = vmatprep.mubr.bf16.mxu0 0
  %222 = vmatmul.mubr.bf16.gmra.mxu0 %v187
  %v223 = vpop.f32.mrf.mxu0
  %v224 = vadd.f32 %v174, %v223
  %v225 = vpop.f32.mrf.mxu0
  %v226 = vpop.f32.mrf.mxu0
  %v227 = vadd.f32 %v178, %v226
  %v228 = vpop.f32.mrf.mxu0
  %229 = vdwg.mxu0
  %v230 = vmul.f32 %v224, 0.5
  %v231 = vmul.f32 %v227, 0.5
  %v232 = vtanh.pop %v230
  %v233 = vtanh.pop %v231
  %v234 = vmul.f32 %v232, 0.5
  %v235 = vmul.f32 %v233, 0.5
  %v236 = vadd.f32 %v234, 0.5
  %v237 = vadd.f32 %v235, 0.5
  %238 = vset.pattern.permute.xlu0 3
  %239 = vperm.xlu0 %238, %v21
  %v240 = vpop.permute.xlu0 %239
  %242 = vset.pattern.permute.xlu0 3
  %243 = vperm.xlu0 %242, %v22
  %v244 = vpop.permute.xlu0 %243
  %v246 = vmul.f32 %v240, %v236
  %v247 = vmul.f32 %v244, %v237
  %v248 = vadd.f32 %v246, %v247
  %v249 = vrot.slane %v248, 4
  %v250 = vadd.f32 %v248, %v249
  %v251 = vrot.slane %v250, 2
  %v252 = vadd.f32 %v250, %v251
  %v253 = vrot.slane %v252, 1
  %v254 = vadd.f32 %v252, %v253
  %256 = vset.pattern.permute.xlu0 2
  %257 = vperm.xlu0 %256, %v25
  %v258 = vpop.permute.xlu0 %257
  %v260 = vadd.f32 %v254, %v258
  %261 = vst [vmem:[%s5] sm:$0x1] %v260
  // Predicated region
  $region22: #{neural_network_regression_forward.1} parent=0 // pred_check
    _
  $region23: #{neural_network_regression_forward.1} parent=0 // pred_check_branch
    %263 = sbr.rel (0) target = $region25
  $region24: #{neural_network_regression_forward.1} parent=0 // pred_region
    _
  $region25: #{neural_network_regression_forward.1} parent=0 // pred_fallthru
    _
  // Predicated region
  $region26: #{neural_network_regression_forward.1} parent=0 // pred_check
    _
  $region27: #{neural_network_regression_forward.1} parent=0 // pred_check_branch
    %265 = sbr.rel (0) target = $region29
  $region28: #{neural_network_regression_forward.1} parent=0 // pred_region
    _
  $region29: #{neural_network_regression_forward.1} parent=0 // pred_fallthru
    _

</llo_original>
